<compile_context>
chip_gen: v7x
topology: tpu7x:2x2x1
jax: 0.10.0
libtpu: 0.0.40
codegen_flags: <defaults>
</compile_context>

<pallas_src>
import functools

import jax
import jax.numpy as jnp
from jax.experimental import pallas as pl
from jax.experimental.pallas import tpu as pltpu


def _round_up(x: int, m: int) -> int:
    return ((x + m - 1) // m) * m


# ---------------------------------------------------------------------------
# Pass 1: tiled Linear (+bias) with per-feature sum / sumsq accumulation.
# grid = (H/tn, N/tm, K/tk)  ->  program ids (j, i, k)
# ---------------------------------------------------------------------------
def _linear_stats_kernel(x_ref, w_ref, b_ref, h_ref, sum_ref, ssq_ref, acc_ref,
                         *, n_actual: int, tm: int):
    i = pl.program_id(1)   # batch tile
    k = pl.program_id(2)   # reduction (Din) tile
    nk = pl.num_programs(2)

    @pl.when(k == 0)
    def _():
        acc_ref[...] = jnp.zeros_like(acc_ref)

    @pl.when(jnp.logical_and(i == 0, k == 0))
    def _():
        sum_ref[...] = jnp.zeros_like(sum_ref)
        ssq_ref[...] = jnp.zeros_like(ssq_ref)

    # x: (tm, tk), w: (tn, tk)  ->  contract on dim 1 of both == x @ w.T  -> (tm, tn)
    acc_ref[...] += jax.lax.dot_general(
        x_ref[...], w_ref[...],
        dimension_numbers=(((1,), (1,)), ((), ())),
        preferred_element_type=jnp.float32)

    @pl.when(k == nk - 1)
    def _():
        hblk = acc_ref[...] + b_ref[...]          # (tm, tn)
        h_ref[...] = hblk
        # Mask padded batch rows out of the statistics.
        rows = jax.lax.broadcasted_iota(jnp.int32, (tm, 1), 0) + i * tm
        valid = (rows < n_actual).astype(jnp.float32)
        hm = hblk * valid
        sum_ref[...] += jnp.sum(hm, axis=0, keepdims=True)
        ssq_ref[...] += jnp.sum(hm * hm, axis=0, keepdims=True)


# ---------------------------------------------------------------------------
# Pass 2: BatchNorm (batch stats) + ReLU + Dropout, elementwise over (tm, tn) blocks.
# grid = (N/tm, H/tn); seed arrives via scalar prefetch (SMEM).
# ---------------------------------------------------------------------------
def _bn_relu_dropout_kernel(seed_ref, h_ref, sum_ref, ssq_ref, gamma_ref, beta_ref, o_ref,
                            *, n_actual: int, h_pad: int, eps: float, drop_p: float,
                            training: bool, tm: int, tn: int):
    inv_n = jnp.float32(1.0 / n_actual)
    mean = sum_ref[...] * inv_n                                   # (1, tn)
    var = jnp.maximum(ssq_ref[...] * inv_n - mean * mean, 0.0)    # biased batch variance
    hblk = h_ref[...]                                             # (tm, tn)

    y = gamma_ref[...] * ((hblk - mean) * jax.lax.rsqrt(var + jnp.float32(eps))) + beta_ref[...]
    y = jnp.maximum(y, 0.0)                                       # ReLU

    if training and drop_p > 0.0:
        if drop_p >= 1.0:
            y = jnp.zeros_like(y)
        else:
            i = pl.program_id(0)
            j = pl.program_id(1)
            rows = jax.lax.broadcasted_iota(jnp.int32, (tm, tn), 0) + i * tm
            cols = jax.lax.broadcasted_iota(jnp.int32, (tm, tn), 1) + j * tn
            idx = rows.astype(jnp.uint32) * jnp.uint32(h_pad) + cols.astype(jnp.uint32)
            seed_u = seed_ref[0].astype(jnp.uint32)
            # Counter-based hash (murmur3 fmix32 style) -> uniform uint32 per element.
            z = idx ^ (seed_u * jnp.uint32(0x9E3779B9))
            z = (z ^ (z >> 16)) * jnp.uint32(0x85EBCA6B)
            z = (z ^ (z >> 13)) * jnp.uint32(0xC2B2AE35)
            z = z ^ (z >> 16)
            # Pure integer threshold compare: P(keep) = 1 - drop_p.
            thresh = jnp.uint32(min(int(round(drop_p * 2.0 ** 32)), 2 ** 32 - 1))
            keep = z >= thresh
            y = jnp.where(keep, y * jnp.float32(1.0 / (1.0 - drop_p)), 0.0)

    o_ref[...] = y.astype(o_ref.dtype)


# ---------------------------------------------------------------------------
# Wrapper
# ---------------------------------------------------------------------------
def fc_bn_relu_dropout(x, weight, bias, gamma, beta, *, drop_p=0.5, eps=1e-5,
                       seed=0, training=True):
    """x: (N, Din) f32; weight: (H, Din) (PyTorch layout); bias/gamma/beta: (H,)."""
    x = jnp.asarray(x, jnp.float32)
    weight = jnp.asarray(weight, jnp.float32)          # kept in (H, Din) layout (no transpose)
    n, din = x.shape
    h_dim = weight.shape[0]

    # Tile sizes: lane-dense (multiples of 128), sublane multiples of 8; footprint stays well
    # under the scoped-VMEM defaults of v5e (16 MiB) / v6e / v7x (32 MiB) with double-buffering.
    tm = min(256, _round_up(n, 8))
    tn = min(512, _round_up(h_dim, 128))
    tk = min(512, _round_up(din, 128))
    n_pad = _round_up(n, tm)
    h_pad = _round_up(h_dim, tn)
    k_pad = _round_up(din, tk)

    xp = jnp.pad(x, ((0, n_pad - n), (0, k_pad - din)))
    wp = jnp.pad(weight, ((0, h_pad - h_dim), (0, k_pad - din)))
    bp = jnp.pad(jnp.asarray(bias, jnp.float32).reshape(1, h_dim), ((0, 0), (0, h_pad - h_dim)))
    gp = jnp.pad(jnp.asarray(gamma, jnp.float32).reshape(1, h_dim), ((0, 0), (0, h_pad - h_dim)))
    bep = jnp.pad(jnp.asarray(beta, jnp.float32).reshape(1, h_dim), ((0, 0), (0, h_pad - h_dim)))
    seed_arr = jnp.asarray([seed], jnp.int32)

    # ---- Pass 1: Linear + stats ----
    grid1 = (h_pad // tn, n_pad // tm, k_pad // tk)
    cost = pl.CostEstimate(
        flops=2 * n_pad * k_pad * h_pad,
        transcendentals=0,
        bytes_accessed=(n_pad * k_pad + k_pad * h_pad + n_pad * h_pad) * 4)
    h_out, s_out, ss_out = pl.pallas_call(
        functools.partial(_linear_stats_kernel, n_actual=n, tm=tm),
        out_shape=(jax.ShapeDtypeStruct((n_pad, h_pad), jnp.float32),
                   jax.ShapeDtypeStruct((1, h_pad), jnp.float32),
                   jax.ShapeDtypeStruct((1, h_pad), jnp.float32)),
        grid_spec=pltpu.PrefetchScalarGridSpec(
            num_scalar_prefetch=0,
            grid=grid1,
            in_specs=[pl.BlockSpec((tm, tk), lambda j, i, k: (i, k)),
                      pl.BlockSpec((tn, tk), lambda j, i, k: (j, k)),
                      pl.BlockSpec((1, tn), lambda j, i, k: (0, j))],
            out_specs=[pl.BlockSpec((tm, tn), lambda j, i, k: (i, j)),
                       pl.BlockSpec((1, tn), lambda j, i, k: (0, j)),
                       pl.BlockSpec((1, tn), lambda j, i, k: (0, j))],
            scratch_shapes=[pltpu.VMEM((tm, tn), jnp.float32)]),
        compiler_params=pltpu.CompilerParams(
            dimension_semantics=("parallel", "arbitrary", "arbitrary"),
            vmem_limit_bytes=32 * 1024 * 1024),
        cost_estimate=cost,
    )(xp, wp, bp)

    # ---- Pass 2: normalize + ReLU + dropout ----
    grid2 = (n_pad // tm, h_pad // tn)
    out = pl.pallas_call(
        functools.partial(_bn_relu_dropout_kernel, n_actual=n, h_pad=h_pad,
                          eps=float(eps), drop_p=float(drop_p),
                          training=bool(training), tm=tm, tn=tn),
        out_shape=jax.ShapeDtypeStruct((n_pad, h_pad), jnp.float32),
        grid_spec=pltpu.PrefetchScalarGridSpec(
            num_scalar_prefetch=1,
            grid=grid2,
            in_specs=[pl.BlockSpec((tm, tn), lambda i, j, s: (i, j)),
                      pl.BlockSpec((1, tn), lambda i, j, s: (0, j)),
                      pl.BlockSpec((1, tn), lambda i, j, s: (0, j)),
                      pl.BlockSpec((1, tn), lambda i, j, s: (0, j)),
                      pl.BlockSpec((1, tn), lambda i, j, s: (0, j))],
            out_specs=pl.BlockSpec((tm, tn), lambda i, j, s: (i, j))),
        compiler_params=pltpu.CompilerParams(
            dimension_semantics=("parallel", "parallel"),
            vmem_limit_bytes=32 * 1024 * 1024),
    )(seed_arr, h_out, s_out, ss_out, gp, bep)

    return out[:n, :h_dim]


def _init_params(key, input_dim, hidden_dims):
    # Deterministic init mirroring nn.Linear's default: U(-1/sqrt(fan_in), 1/sqrt(fan_in)).
    kw, kb = jax.random.split(key)
    bound = 1.0 / (input_dim ** 0.5)
    weight = jax.random.uniform(kw, (hidden_dims, input_dim), jnp.float32, -bound, bound)
    bias = jax.random.uniform(kb, (hidden_dims,), jnp.float32, -bound, bound)
    gamma = jnp.ones((hidden_dims,), jnp.float32)   # BatchNorm1d weight
    beta = jnp.zeros((hidden_dims,), jnp.float32)   # BatchNorm1d bias
    return weight, bias, gamma, beta


def _reference_no_dropout(x, weight, bias, gamma, beta, eps):
    h = x @ weight.T + bias
    mean = jnp.mean(h, axis=0, keepdims=True)
    var = jnp.mean((h - mean) ** 2, axis=0, keepdims=True)   # biased batch variance
    return jnp.maximum(gamma * (h - mean) / jnp.sqrt(var + eps) + beta, 0.0)


# TODO(synk): BatchNorm running_mean/running_var tracking (and eval-mode normalization with
#             running stats) is not implemented; this kernel covers the training-mode forward.

if __name__ == "__main__":
    key = jax.random.PRNGKey(0)
    k_x, k_p = jax.random.split(key)

    batch, input_dim, hidden_dims = 8, 16, 32
    drop_p = 0.5

    x = jax.random.normal(k_x, (batch, input_dim), jnp.float32)
    weight, bias, gamma, beta = _init_params(k_p, input_dim, hidden_dims)

    # Correctness check of the deterministic part (dropout disabled).
    got = fc_bn_relu_dropout(x, weight, bias, gamma, beta, drop_p=0.0, seed=0, training=True)
    ref = _reference_no_dropout(x, weight, bias, gamma, beta, 1e-5)
    assert got.shape == (batch, hidden_dims)
    assert bool(jnp.allclose(got, ref, atol=1e-4, rtol=1e-4)), "mismatch vs reference"

    # Full forward with dropout.
    out = fc_bn_relu_dropout(x, weight, bias, gamma, beta,
                             drop_p=drop_p, seed=0, training=True)
    out = jax.block_until_ready(out)

    assert out.shape == (batch, hidden_dims)
    assert bool(jnp.all(jnp.isfinite(out)))
    print("KERNEL_OK")
</pallas_src>

<mosaic_0001>
module attributes {stable_mosaic.version = 11 : i64} {
  func.func @_linear_stats_kernel(%arg0: i32, %arg1: i32, %arg2: i32, %arg3: memref<8x128xf32, #tpu.memory_space<vmem>>, %arg4: memref<128x128xf32, #tpu.memory_space<vmem>>, %arg5: memref<1x128xf32, #tpu.memory_space<vmem>>, %arg6: memref<8x128xf32, #tpu.memory_space<vmem>>, %arg7: memref<1x128xf32, #tpu.memory_space<vmem>>, %arg8: memref<1x128xf32, #tpu.memory_space<vmem>>, %arg9: memref<8x128xf32, #tpu.memory_space<vmem>>) attributes {dimension_semantics = [#tpu.dimension_semantics<parallel>, #tpu.dimension_semantics<arbitrary>, #tpu.dimension_semantics<arbitrary>], iteration_bounds = array<i64: 1, 1, 1>, scalar_prefetch = 0 : i64, scratch_operands = 1 : i64, tpu.core_type = #tpu.core_type<tc>, window_params = [{transform_indices = @transform_0, window_bounds = array<i64: 8, 128>}, {transform_indices = @transform_1, window_bounds = array<i64: 128, 128>}, {transform_indices = @transform_2, window_bounds = array<i64: 1, 128>}, {transform_indices = @transform_3, window_bounds = array<i64: 8, 128>}, {transform_indices = @transform_4, window_bounds = array<i64: 1, 128>}, {transform_indices = @transform_5, window_bounds = array<i64: 1, 128>}]} {
    %c0_i32 = arith.constant 0 : i32
    %0 = arith.cmpi eq, %arg2, %c0_i32 : i32
    %1 = arith.extui %0 : i1 to i32
    %c0_i32_0 = arith.constant 0 : i32
    %2 = arith.cmpi ne, %1, %c0_i32_0 : i32
    scf.if %2 {
      %cst_13 = arith.constant 0.000000e+00 : f32
      %17 = vector.broadcast %cst_13 : f32 to vector<8x128xf32>
      %c0_14 = arith.constant 0 : index
      %c0_15 = arith.constant 0 : index
      %18 = vector.load %arg9[%c0_14, %c0_15] : memref<8x128xf32, #tpu.memory_space<vmem>>, vector<8x128xf32>
      tpu.vector_store %arg9[%c0_14, %c0_15], %17 {strides = array<i32>} : memref<8x128xf32, #tpu.memory_space<vmem>>, vector<8x128xf32>,
    } else {
    }
    %c0_i32_1 = arith.constant 0 : i32
    %3 = arith.cmpi eq, %arg1, %c0_i32_1 : i32
    %c0_i32_2 = arith.constant 0 : i32
    %4 = arith.cmpi eq, %arg2, %c0_i32_2 : i32
    %5 = arith.andi %3, %4 : i1
    %6 = arith.extui %5 : i1 to i32
    %c0_i32_3 = arith.constant 0 : i32
    %7 = arith.cmpi ne, %6, %c0_i32_3 : i32
    scf.if %7 {
      %cst_13 = arith.constant 0.000000e+00 : f32
      %17 = vector.broadcast %cst_13 : f32 to vector<1x128xf32>
      %c0_14 = arith.constant 0 : index
      %c0_15 = arith.constant 0 : index
      %18 = vector.load %arg7[%c0_14, %c0_15] : memref<1x128xf32, #tpu.memory_space<vmem>>, vector<1x128xf32>
      tpu.vector_store %arg7[%c0_14, %c0_15], %17 {strides = array<i32>} : memref<1x128xf32, #tpu.memory_space<vmem>>, vector<1x128xf32>,
      %cst_16 = arith.constant 0.000000e+00 : f32
      %19 = vector.broadcast %cst_16 : f32 to vector<1x128xf32>
      %c0_17 = arith.constant 0 : index
      %c0_18 = arith.constant 0 : index
      %20 = vector.load %arg8[%c0_17, %c0_18] : memref<1x128xf32, #tpu.memory_space<vmem>>, vector<1x128xf32>
      tpu.vector_store %arg8[%c0_17, %c0_18], %19 {strides = array<i32>} : memref<1x128xf32, #tpu.memory_space<vmem>>, vector<1x128xf32>,
    } else {
    }
    %c0 = arith.constant 0 : index
    %c0_4 = arith.constant 0 : index
    %8 = vector.load %arg9[%c0, %c0_4] : memref<8x128xf32, #tpu.memory_space<vmem>>, vector<8x128xf32>
    %c0_5 = arith.constant 0 : index
    %c0_6 = arith.constant 0 : index
    %9 = vector.load %arg3[%c0_5, %c0_6] : memref<8x128xf32, #tpu.memory_space<vmem>>, vector<8x128xf32>
    %c0_7 = arith.constant 0 : index
    %c0_8 = arith.constant 0 : index
    %10 = vector.load %arg4[%c0_7, %c0_8] : memref<128x128xf32, #tpu.memory_space<vmem>>, vector<128x128xf32>
    %cst = arith.constant dense<0.000000e+00> : vector<8x128xf32>
    %11 = tpu.matmul %9, %10, %cst {dimension_numbers = #tpu.dot_dimension_numbers<[1], [1], [0], [0], [0, 0, 1, 0], [], []>} : vector<8x128xf32>, vector<128x128xf32>, vector<8x128xf32> -> vector<8x128xf32>
    %12 = arith.addf %8, %11 : vector<8x128xf32>
    %c0_9 = arith.constant 0 : index
    %c0_10 = arith.constant 0 : index
    %13 = vector.load %arg9[%c0_9, %c0_10] : memref<8x128xf32, #tpu.memory_space<vmem>>, vector<8x128xf32>
    tpu.vector_store %arg9[%c0_9, %c0_10], %12 {strides = array<i32>} : memref<8x128xf32, #tpu.memory_space<vmem>>, vector<8x128xf32>,
    %c0_i32_11 = arith.constant 0 : i32
    %14 = arith.cmpi eq, %arg2, %c0_i32_11 : i32
    %15 = arith.extui %14 : i1 to i32
    %c0_i32_12 = arith.constant 0 : i32
    %16 = arith.cmpi ne, %15, %c0_i32_12 : i32
    scf.if %16 {
      %c0_13 = arith.constant 0 : index
      %c0_14 = arith.constant 0 : index
      %17 = vector.load %arg9[%c0_13, %c0_14] : memref<8x128xf32, #tpu.memory_space<vmem>>, vector<8x128xf32>
      %c0_15 = arith.constant 0 : index
      %c0_16 = arith.constant 0 : index
      %18 = vector.load %arg5[%c0_15, %c0_16] : memref<1x128xf32, #tpu.memory_space<vmem>>, vector<1x128xf32>
      %19 = vector.broadcast %18 : vector<1x128xf32> to vector<8x128xf32>
      %20 = arith.addf %17, %19 : vector<8x128xf32>
      %c0_17 = arith.constant 0 : index
      %c0_18 = arith.constant 0 : index
      %21 = vector.load %arg6[%c0_17, %c0_18] : memref<8x128xf32, #tpu.memory_space<vmem>>, vector<8x128xf32>
      tpu.vector_store %arg6[%c0_17, %c0_18], %20 {strides = array<i32>} : memref<8x128xf32, #tpu.memory_space<vmem>>, vector<8x128xf32>,
      %22 = tpu.iota {dimensions = array<i32: 0>} : vector<8x1xi32>
      %c8_i32 = arith.constant 8 : i32
      %23 = arith.muli %arg1, %c8_i32 : i32
      %24 = vector.broadcast %23 : i32 to vector<8x1xi32>
      %25 = arith.addi %22, %24 : vector<8x1xi32>
      %c8_i32_19 = arith.constant 8 : i32
      %26 = vector.broadcast %c8_i32_19 : i32 to vector<8x1xi32>
      %27 = arith.cmpi slt, %25, %26 : vector<8x1xi32>
      %28 = arith.extui %27 : vector<8x1xi1> to vector<8x1xi32>
      %29 = arith.sitofp %28 : vector<8x1xi32> to vector<8x1xf32>
      %30 = vector.broadcast %29 : vector<8x1xf32> to vector<8x128xf32>
      %31 = arith.mulf %20, %30 : vector<8x128xf32>
      %c0_20 = arith.constant 0 : index
      %c0_21 = arith.constant 0 : index
      %32 = vector.load %arg7[%c0_20, %c0_21] : memref<1x128xf32, #tpu.memory_space<vmem>>, vector<1x128xf32>
      %cst_22 = arith.constant dense<0.000000e+00> : vector<128xf32>
      %33 = vector.multi_reduction <add>, %31, %cst_22 [0] : vector<8x128xf32> to vector<128xf32>
      %34 = vector.shape_cast %33 : vector<128xf32> to vector<1x128xf32>
      %35 = arith.addf %32, %34 : vector<1x128xf32>
      %c0_23 = arith.constant 0 : index
      %c0_24 = arith.constant 0 : index
      %36 = vector.load %arg7[%c0_23, %c0_24] : memref<1x128xf32, #tpu.memory_space<vmem>>, vector<1x128xf32>
      tpu.vector_store %arg7[%c0_23, %c0_24], %35 {strides = array<i32>} : memref<1x128xf32, #tpu.memory_space<vmem>>, vector<1x128xf32>,
      %c0_25 = arith.constant 0 : index
      %c0_26 = arith.constant 0 : index
      %37 = vector.load %arg8[%c0_25, %c0_26] : memref<1x128xf32, #tpu.memory_space<vmem>>, vector<1x128xf32>
      %38 = arith.mulf %31, %31 : vector<8x128xf32>
      %cst_27 = arith.constant dense<0.000000e+00> : vector<128xf32>
      %39 = vector.multi_reduction <add>, %38, %cst_27 [0] : vector<8x128xf32> to vector<128xf32>
      %40 = vector.shape_cast %39 : vector<128xf32> to vector<1x128xf32>
      %41 = arith.addf %37, %40 : vector<1x128xf32>
      %c0_28 = arith.constant 0 : index
      %c0_29 = arith.constant 0 : index
      %42 = vector.load %arg8[%c0_28, %c0_29] : memref<1x128xf32, #tpu.memory_space<vmem>>, vector<1x128xf32>
      tpu.vector_store %arg8[%c0_28, %c0_29], %41 {strides = array<i32>} : memref<1x128xf32, #tpu.memory_space<vmem>>, vector<1x128xf32>,
    } else {
    }
    return
  }
  func.func @transform_0(%arg0: i32, %arg1: i32, %arg2: i32) -> (i32, i32) {
    %c0_i32 = arith.constant 0 : i32
    return %arg1, %arg2 : i32, i32
  }
  func.func @transform_1(%arg0: i32, %arg1: i32, %arg2: i32) -> (i32, i32) {
    %c0_i32 = arith.constant 0 : i32
    return %arg0, %arg2 : i32, i32
  }
  func.func @transform_2(%arg0: i32, %arg1: i32, %arg2: i32) -> (i32, i32) {
    %c0_i32 = arith.constant 0 : i32
    %c0_i32_0 = arith.constant 0 : i32
    return %c0_i32, %arg0 : i32, i32
  }
  func.func @transform_3(%arg0: i32, %arg1: i32, %arg2: i32) -> (i32, i32) {
    %c0_i32 = arith.constant 0 : i32
    return %arg1, %arg0 : i32, i32
  }
  func.func @transform_4(%arg0: i32, %arg1: i32, %arg2: i32) -> (i32, i32) {
    %c0_i32 = arith.constant 0 : i32
    %c0_i32_0 = arith.constant 0 : i32
    return %c0_i32, %arg0 : i32, i32
  }
  func.func @transform_5(%arg0: i32, %arg1: i32, %arg2: i32) -> (i32, i32) {
    %c0_i32 = arith.constant 0 : i32
    %c0_i32_0 = arith.constant 0 : i32
    return %c0_i32, %arg0 : i32, i32
  }
}

</mosaic_0001>

<llo_original>
// kernel: tpu_custom_call.1
$region0: #{tpu_custom_call.1}
  #allocation0 [shape = 'u32[]', space=smem, size = 0x4, offset = 0x4, fixed_abs, tag = 'smem constant byte address 0x4 - core index']
  #allocation1 [shape = 'u32[144,128]{1,0:T(1,128)}', space=vmem, size = 0x12000, scoped, tag = 'internal scratch']
  #allocation2 [shape = 'f32[8,128]{1,0:T(8,128)}', space=vmem, size = 0x1000, scoped, tag = 'scratch operand']
  %s0 = inlined_call_operand.hbm [shape: f32[8,128], index: 0, kind: input, shape index: {}]
  %s1 = inlined_call_operand.hbm [shape: f32[128,128], index: 1, kind: input, shape index: {}]
  %s2 = inlined_call_operand.vmem [shape: f32[1,128], index: 2, kind: input, shape index: {}]
  %s3 = inlined_call_operand.hbm [shape: f32[8,128], index: 3, kind: output, shape index: {0}]
  %s4 = inlined_call_operand.hbm [shape: f32[1,128], index: 4, kind: output, shape index: {1}]
  %s5 = inlined_call_operand.hbm [shape: f32[1,128], index: 5, kind: output, shape index: {2}]
  %6 = xla_tuple %s3, %s4, %s5
  %s7 = sld [smem:[#allocation0]]
  $region58: #{tpu_custom_call.1} parent=0
    _
  %s9 = ssub.s32 1, %s7
  %s10 = scalar_select 0, %s9, %s7
  $region1: #{tpu_custom_call.1} parent=0
    #allocation3 [shape = 'u8[4096]{0}', space=vmem, size = 0x1000, scoped, tag = 'input window, operand 0, single buffered']
    #allocation4 [shape = 's32[1]{0}', space=sflag, size = 0x4, scoped, tag = 'scoped memory for tpu_custom_call.1']
    #allocation5 [shape = 's32[1]{0}', space=sflag, size = 0x4, scoped, tag = 'scoped memory for tpu_custom_call.1']
    #allocation6 [shape = 'u8[65536]{0}', space=vmem, size = 0x10000, scoped, tag = 'input window, operand 1, single buffered']
    #allocation7 [shape = 's32[1]{0}', space=sflag, size = 0x4, scoped, tag = 'scoped memory for tpu_custom_call.1']
    #allocation8 [shape = 'u8[4096]{0}', space=vmem, size = 0x1000, scoped, tag = 'output window, operand 0, single buffered']
    #allocation9 [shape = 'u8[512]{0}', space=vmem, size = 0x400, scoped, tag = 'output window, operand 1, single buffered']
    #allocation10 [shape = 's32[1]{0}', space=sflag, size = 0x4, scoped, tag = 'scoped memory for tpu_custom_call.1']
    #allocation11 [shape = 'u8[512]{0}', space=vmem, size = 0x400, scoped, tag = 'output window, operand 2, single buffered']
    %11 = vsyncpa [#allocation4], 0
    %12 = vsyncpa [#allocation7], 0
    %13 = vsyncpa [#allocation5], 0
    %14 = vsyncpa [#allocation10], 0
    // Predicated region
    $region2: #{tpu_custom_call.1} parent=1 // pred_check
      _
    $region3: #{tpu_custom_call.1} parent=1 // pred_check_branch
      %16 = sbr.rel (0) target = $region5
    $region4: #{tpu_custom_call.1} parent=1 // pred_region
      %s18 = ssub.s32 128, 128
      %19 = vsyncadd [#allocation4], %s18
      %s21 = sshll.u32 [#allocation3], 4
      %s22 = int_to_ptr.vmem [resolvable:$true] %s21
      %24 = dma.hbm_to_vmem [thread:$0]  %s0, 128, %s22, [#allocation4]
    $region5: #{tpu_custom_call.1} parent=1 // pred_fallthru
      _
    // Predicated region
    $region6: #{tpu_custom_call.1} parent=1 // pred_check
      _
    $region7: #{tpu_custom_call.1} parent=1 // pred_check_branch
      %26 = sbr.rel (0) target = $region9
    $region8: #{tpu_custom_call.1} parent=1 // pred_region
      %s28 = ssub.s32 2048, 2048
      %29 = vsyncadd [#allocation7], %s28
      %s30 = sshll.u32 [#allocation6], 4
      %s31 = int_to_ptr.vmem [resolvable:$true] %s30
      %36 = dma.hbm_to_vmem [thread:$0]  %s1, 2048, %s31, [#allocation7], 128, 128, 8
    $region9: #{tpu_custom_call.1} parent=1 // pred_fallthru
      _
    // Predicated region
    $region10: #{tpu_custom_call.1} parent=1 // pred_check
      _
    $region11: #{tpu_custom_call.1} parent=1 // pred_check_branch
      %38 = sbr.rel (0) target = $region13
    $region12: #{tpu_custom_call.1} parent=1 // pred_region
      _
    $region13: #{tpu_custom_call.1} parent=1 // pred_fallthru
      _
    // Predicated region
    $region14: #{tpu_custom_call.1} parent=1 // pred_check
      _
    $region15: #{tpu_custom_call.1} parent=1 // pred_check_branch
      %40 = sbr.rel (0) target = $region17
    $region16: #{tpu_custom_call.1} parent=1 // pred_region
      %41 = dma.done [#allocation4], 128
    $region17: #{tpu_custom_call.1} parent=1 // pred_fallthru
      _
    // Predicated region
    $region18: #{tpu_custom_call.1} parent=1 // pred_check
      _
    $region19: #{tpu_custom_call.1} parent=1 // pred_check_branch
      %43 = sbr.rel (0) target = $region21
    $region20: #{tpu_custom_call.1} parent=1 // pred_region
      %44 = dma.done [#allocation7], 2048
    $region21: #{tpu_custom_call.1} parent=1 // pred_fallthru
      _
    %p45 = scmp.eq.s32.totalorder 0, 0
    // Predicated region
    $region22: #{tpu_custom_call.1} parent=1 // pred_check
      %p46 = pneg %p45
    $region23: #{tpu_custom_call.1} parent=1 // pred_check_branch
      %48 = sbr.rel (%p46) target = $region25
    $region24: #{tpu_custom_call.1} parent=1 // pred_region
      %49 = vst [vmem:[#allocation2] sm:$0xff] 0.0
    $region25: #{tpu_custom_call.1} parent=1 // pred_fallthru
      _
    %p50 = scmp.eq.s32.totalorder 0, 0
    %p51 = pnand %p50, %p45
    %p52 = pneg %p51
    // Predicated region
    $region26: #{tpu_custom_call.1} parent=1 // pred_check
      _
    $region27: #{tpu_custom_call.1} parent=1 // pred_check_branch
      %54 = sbr.rel (%p51) target = $region29
    $region28: #{tpu_custom_call.1} parent=1 // pred_region
      %55 = vst [vmem:[#allocation9] sm:$0x1] 0.0
      %56 = vst [vmem:[#allocation11] sm:$0x1] 0.0
    $region29: #{tpu_custom_call.1} parent=1 // pred_fallthru
      _
    %v57 = vld [vmem:[#allocation2] sm:$0xff]
    %v58 = vld [vmem:[#allocation3] sm:$0xff]
    %v59 = vld [vmem:[#allocation6] sm:$0xff]
    %v60 = vld [vmem:[#allocation6 + $0x8] sm:$0xff]
    %v61 = vld [vmem:[#allocation6 + $0x10] sm:$0xff]
    %v62 = vld [vmem:[#allocation6 + $0x18] sm:$0xff]
    %v63 = vld [vmem:[#allocation6 + $0x20] sm:$0xff]
    %v64 = vld [vmem:[#allocation6 + $0x28] sm:$0xff]
    %v65 = vld [vmem:[#allocation6 + $0x30] sm:$0xff]
    %v66 = vld [vmem:[#allocation6 + $0x38] sm:$0xff]
    %v67 = vld [vmem:[#allocation6 + $0x40] sm:$0xff]
    %v68 = vld [vmem:[#allocation6 + $0x48] sm:$0xff]
    %v69 = vld [vmem:[#allocation6 + $0x50] sm:$0xff]
    %v70 = vld [vmem:[#allocation6 + $0x58] sm:$0xff]
    %v71 = vld [vmem:[#allocation6 + $0x60] sm:$0xff]
    %v72 = vld [vmem:[#allocation6 + $0x68] sm:$0xff]
    %v73 = vld [vmem:[#allocation6 + $0x70] sm:$0xff]
    %v74 = vld [vmem:[#allocation6 + $0x78] sm:$0xff]
    %75 = vmatprep.subr.mxu0 0.0
    %76 = vmatpush1.xpose.msra.mxu0 %v59
    %77 = vmatprep.subr.mxu0 0.0
    %78 = vmatpush1.xpose.msra.mxu0 %v60
    %79 = vmatprep.subr.mxu0 0.0
    %80 = vmatpush1.xpose.msra.mxu0 %v61
    %81 = vmatprep.subr.mxu0 0.0
    %82 = vmatpush1.xpose.msra.mxu0 %v62
    %83 = vmatprep.subr.mxu0 0.0
    %84 = vmatpush1.xpose.msra.mxu0 %v63
    %85 = vmatprep.subr.mxu0 0.0
    %86 = vmatpush1.xpose.msra.mxu0 %v64
    %87 = vmatprep.subr.mxu0 0.0
    %88 = vmatpush1.xpose.msra.mxu0 %v65
    %89 = vmatprep.subr.mxu0 0.0
    %90 = vmatpush1.xpose.msra.mxu0 %v66
    %91 = vmatprep.subr.mxu0 0.0
    %92 = vmatpush1.xpose.msra.mxu0 %v67
    %93 = vmatprep.subr.mxu0 0.0
    %94 = vmatpush1.xpose.msra.mxu0 %v68
    %95 = vmatprep.subr.mxu0 0.0
    %96 = vmatpush1.xpose.msra.mxu0 %v69
    %97 = vmatprep.subr.mxu0 0.0
    %98 = vmatpush1.xpose.msra.mxu0 %v70
    %99 = vmatprep.subr.mxu0 0.0
    %100 = vmatpush1.xpose.msra.mxu0 %v71
    %101 = vmatprep.subr.mxu0 0.0
    %102 = vmatpush1.xpose.msra.mxu0 %v72
    %103 = vmatprep.subr.mxu0 0.0
    %104 = vmatpush1.xpose.msra.mxu0 %v73
    %105 = vmatprep.subr.mxu0 0.0
    %106 = vmatpush1.xpose.msra.mxu0 %v74
    %107 = vmatprep.subr.mxu0 0.0
    %108 = vmatpush1.xpose.msra.mxu0 0.0
    %109 = vmatprep.subr.mxu0 0.0
    %110 = vmatpush1.xpose.msra.mxu0 0.0
    %111 = vmatprep.subr.mxu0 0.0
    %112 = vmatpush1.xpose.msra.mxu0 0.0
    %113 = vmatprep.subr.mxu0 0.0
    %114 = vmatpush1.xpose.msra.mxu0 0.0
    %115 = vmatprep.subr.mxu0 0.0
    %116 = vmatpush1.xpose.msra.mxu0 0.0
    %117 = vmatprep.subr.mxu0 0.0
    %118 = vmatpush1.xpose.msra.mxu0 0.0
    %119 = vmatprep.subr.mxu0 0.0
    %120 = vmatpush1.xpose.msra.mxu0 0.0
    %121 = vmatprep.subr.mxu0 0.0
    %122 = vmatpush1.xpose.msra.mxu0 0.0
    %123 = vmatprep.subr.mxu0 0.0
    %124 = vmatpush1.xpose.msra.mxu0 0.0
    %125 = vmatprep.subr.mxu0 0.0
    %126 = vmatpush1.xpose.msra.mxu0 0.0
    %127 = vmatprep.subr.mxu0 0.0
    %128 = vmatpush1.xpose.msra.mxu0 0.0
    %129 = vmatprep.subr.mxu0 0.0
    %130 = vmatpush1.xpose.msra.mxu0 0.0
    %131 = vmatprep.subr.mxu0 0.0
    %132 = vmatpush1.xpose.msra.mxu0 0.0
    %133 = vmatprep.subr.mxu0 0.0
    %134 = vmatpush1.xpose.msra.mxu0 0.0
    %135 = vmatprep.subr.mxu0 0.0
    %136 = vmatpush1.xpose.msra.mxu0 0.0
    %137 = vmatprep.subr.mxu0 0.0
    %138 = vmatpush1.xpose.msra.mxu0 0.0
    %139 = vmatprep.mubr.f32.mxu0 0.0
    %140 = vmatmul.mubr.f32.gmra.mrb[0].mxu0 %v58
    %v141 = vpop.f32.mrb[0].mxu0
    %v142 = vadd.f32 0.0, %v141
    %v143 = vpop.f32.mrb[0].mxu0
    %144 = vdwg.mxu0
    %v145 = vadd.f32 %v57, %v142
    %146 = vst [vmem:[#allocation2] sm:$0xff] %v145
    // Predicated region
    $region30: #{tpu_custom_call.1} parent=1 // pred_check
      %p147 = pneg %p45
    $region31: #{tpu_custom_call.1} parent=1 // pred_check_branch
      %149 = sbr.rel (%p147) target = $region33
    $region32: #{tpu_custom_call.1} parent=1 // pred_region
      %v150 = vld [vmem:[#allocation2] sm:$0xff]
      %v151 = vld [vmem:[%s2] sm:$0x1]
      %v153 = vlaneseq
      %v154 = vshrl.u32 %v153, 7
      %v155 = vsub.s32 0, %v154
      %v156 = vrot.slane %v151, %v155
      %v158 = vadd.f32 %v150, %v156
      %159 = vst [vmem:[#allocation8] sm:$0xff] %v158
      %v160 = vlaneseq
      %v161 = vshrl.u32 %v160, 7
      %s162 = smul.u32 0, 8
      %v163 = vstv %s162
      %v164 = vadd.s32 %v161, %v163
      %vm165 = vcmp.lt.s32.totalorder %v164, 8
      %v166 = vsel %vm165, 1, 0
      %v167 = vcvt.s32.f32 %v166
      %v168 = vmul.f32 %v158, %v167
      %v169 = vld [vmem:[#allocation9] sm:$0x1]
      %v170 = vrot.slane %v168, 4
      %v171 = vadd.f32 %v168, %v170
      %v172 = vrot.slane %v171, 2
      %v173 = vadd.f32 %v171, %v172
      %v174 = vrot.slane %v173, 1
      %v175 = vadd.f32 %v173, %v174
      %v176 = vadd.f32 %v169, %v175
      %177 = vst [vmem:[#allocation9] sm:$0x1] %v176
      %v178 = vld [vmem:[#allocation11] sm:$0x1]
      %v179 = vmul.f32 %v168, %v168
      %v180 = vrot.slane %v179, 4
      %v181 = vadd.f32 %v179, %v180
      %v182 = vrot.slane %v181, 2
      %v183 = vadd.f32 %v181, %v182
      %v184 = vrot.slane %v183, 1
      %v185 = vadd.f32 %v183, %v184
      %v186 = vadd.f32 %v178, %v185
      %187 = vst [vmem:[#allocation11] sm:$0x1] %v186
    $region33: #{tpu_custom_call.1} parent=1 // pred_fallthru
      _
    // Predicated region
    $region34: #{tpu_custom_call.1} parent=1 // pred_check
      _
    $region35: #{tpu_custom_call.1} parent=1 // pred_check_branch
      %189 = sbr.rel (0) target = $region37
    $region36: #{tpu_custom_call.1} parent=1 // pred_region
      %s191 = ssub.s32 128, 128
      %192 = vsyncadd [#allocation5], %s191
      %s194 = sshll.u32 [#allocation8], 4
      %s195 = int_to_ptr.vmem [resolvable:$true] %s194
      %197 = dma.vmem_to_hbm [thread:$0]  %s195, 128, %s3, [#allocation5]
    $region37: #{tpu_custom_call.1} parent=1 // pred_fallthru
      _
    // Predicated region
    $region38: #{tpu_custom_call.1} parent=1 // pred_check
      _
    $region39: #{tpu_custom_call.1} parent=1 // pred_check_branch
      %199 = sbr.rel (0) target = $region41
    $region40: #{tpu_custom_call.1} parent=1 // pred_region
      %s201 = ssub.s32 16, 16
      %202 = vsyncadd [#allocation10], %s201
      %s204 = sshll.u32 [#allocation9], 4
      %s205 = int_to_ptr.vmem [resolvable:$true] %s204
      %207 = dma.vmem_to_hbm [thread:$0]  %s205, 16, %s4, [#allocation10]
    $region41: #{tpu_custom_call.1} parent=1 // pred_fallthru
      _
    // Predicated region
    $region42: #{tpu_custom_call.1} parent=1 // pred_check
      _
    $region43: #{tpu_custom_call.1} parent=1 // pred_check_branch
      %209 = sbr.rel (0) target = $region45
    $region44: #{tpu_custom_call.1} parent=1 // pred_region
      %s211 = ssub.s32 16, 16
      %212 = vsyncadd [#allocation10], %s211
      %s214 = sshll.u32 [#allocation11], 4
      %s215 = int_to_ptr.vmem [resolvable:$true] %s214
      %217 = dma.vmem_to_hbm [thread:$0]  %s215, 16, %s5, [#allocation10]
    $region45: #{tpu_custom_call.1} parent=1 // pred_fallthru
      _
    // Predicated region
    $region46: #{tpu_custom_call.1} parent=1 // pred_check
      _
    $region47: #{tpu_custom_call.1} parent=1 // pred_check_branch
      %219 = sbr.rel (0) target = $region49
    $region48: #{tpu_custom_call.1} parent=1 // pred_region
      %220 = dma.done [#allocation5], 128
    $region49: #{tpu_custom_call.1} parent=1 // pred_fallthru
      _
    // Predicated region
    $region50: #{tpu_custom_call.1} parent=1 // pred_check
      _
    $region51: #{tpu_custom_call.1} parent=1 // pred_check_branch
      %222 = sbr.rel (0) target = $region53
    $region52: #{tpu_custom_call.1} parent=1 // pred_region
      %223 = dma.done [#allocation10], 16
    $region53: #{tpu_custom_call.1} parent=1 // pred_fallthru
      _
    // Predicated region
    $region54: #{tpu_custom_call.1} parent=1 // pred_check
      _
    $region55: #{tpu_custom_call.1} parent=1 // pred_check_branch
      %225 = sbr.rel (0) target = $region57
    $region56: #{tpu_custom_call.1} parent=1 // pred_region
      %226 = dma.done [#allocation10], 16
    $region57: #{tpu_custom_call.1} parent=1 // pred_fallthru
      _
    %227 = vsyncpa [#allocation4], 1
    %228 = vsyncpa [#allocation7], 1
    %229 = vsyncpa [#allocation5], 1
    %230 = vsyncpa [#allocation10], 1

</llo_original>
